<compile_context>
chip_gen: v7x
topology: tpu7x:2x2x1
jax: 0.10.0
libtpu: 0.0.40
codegen_flags: <defaults>
</compile_context>

<pallas_src>
import numpy as np
import jax
import jax.numpy as jnp
from jax.experimental import pallas as pl
from jax.experimental.pallas import tpu as pltpu


def _round_up(x, m):
    return ((x + m - 1) // m) * m


# ----------------------------- fused loss kernel ----------------------------

def _make_kernel(lpad, terms, lim_off, hidden_meta):
    """All offsets / row counts in `terms` are static Python ints, multiples
    of 8, so every ref slice below is a tile-aligned zero-cost view."""
    f32 = jnp.float32

    def kernel(buf_ref, out_ref):
        acc_out = jnp.zeros((8, lpad), f32)
        acc_hint = jnp.zeros((8, lpad), f32)
        acc_nan = jnp.zeros((8, lpad), f32)

        limblk = buf_ref[lim_off:lim_off + 8, :] if lim_off is not None else None
        mask_cache = {}

        def time_mask(row, t_pad, t_true):
            # mask[t, n] = (t <= lim[n]) built in-kernel; padded lanes carry
            # lim = -1 so they are masked out; padded time rows are killed by
            # the (t < t_true) factor when T is not a multiple of 8.
            key = (row, t_pad, t_true)
            if key not in mask_cache:
                lim = limblk[row:row + 1, :]                                  # (1, lpad)
                ti = jax.lax.broadcasted_iota(jnp.int32, (t_pad, lpad), 0).astype(f32)
                m = (ti <= lim).astype(f32)
                if t_true < t_pad:
                    m = m * (ti < np.float32(t_true)).astype(f32)
                mask_cache[key] = m
            return mask_cache[key]

        def fold(v):
            # (k*8, lpad) or (C, t_pad, lpad) -> (8, lpad); pure VALU vreg adds
            return jnp.sum(v.reshape(-1, 8, lpad), axis=0)

        for tm in terms:
            rows = tm['rows']
            p = buf_ref[tm['po']:tm['po'] + rows, :]
            z = buf_ref[tm['to']:tm['to'] + rows, :]
            typ = tm['type']
            if typ == 'scalar':
                d = p - z
                val = d * d
            elif typ == 'mask':
                # numerically stable BCE-with-logits (PyTorch formula)
                val = jnp.maximum(p, 0.0) - p * z + jnp.log1p(jnp.exp(-jnp.abs(p)))
            else:  # mask_one / pointer / categorical: -sum(scatter(x)) == -sum(x)
                val = -(p * z)

            if tm['lim_row'] is not None:            # hint time-mask (in-kernel)
                m = time_mask(tm['lim_row'], tm['t_pad'], tm['t_true'])
                if typ == 'categorical':
                    val = val.reshape(tm['C'], tm['t_pad'], lpad) * m[None]
                else:
                    val = val * m
            elif tm['mo'] is not None:               # explicit mask (standalone API)
                mv = buf_ref[tm['mo']:tm['mo'] + tm['mrows'], :]
                if typ == 'categorical':
                    val = val.reshape(tm['C'], tm['t_pad'], lpad) * mv[None]
                else:
                    val = val * mv
            elif tm['need_valid']:                   # BCE padding is log(2), mask it
                ri = jax.lax.broadcasted_iota(jnp.int32, (rows, lpad), 0)
                ci = jax.lax.broadcasted_iota(jnp.int32, (rows, lpad), 1)
                val = val * ((ri < tm['valid_rows'])
                             & (ci < tm['valid_lanes'])).astype(f32)

            contrib = fold(val) * np.float32(1.0 / tm['divisor'])
            if tm['group'] == 'output':
                acc_out = acc_out + contrib
                acc_nan = acc_nan + fold((p != p).astype(f32))   # fused NaN count
            else:
                acc_hint = acc_hint + contrib

        if hidden_meta is not None:
            ho, hrows, n_true = hidden_meta
            h = buf_ref[ho:ho + hrows, :]
            row_sq = jnp.sum(h * h, axis=1, keepdims=True)       # (rows, 1)
            hid = jnp.sum(jnp.sqrt(row_sq)) * np.float32(1.0 / n_true)
        else:
            hid = jnp.float32(0.0)

        # one cross-lane reduce per group
        out_ref[0, 0] = jnp.sum(acc_out)
        out_ref[0, 1] = jnp.sum(acc_hint)
        out_ref[0, 2] = hid
        out_ref[0, 3] = jnp.sum(acc_nan)

    return kernel


def _run_packed(packed, lpad, terms, lim_off, hidden_meta):
    kernel = _make_kernel(lpad, tuple(terms), lim_off, hidden_meta)
    vmem_bytes = int(packed.size) * 4
    cp = None
    if vmem_bytes > (8 << 20):
        # budget VMEM explicitly for big batches (v5e's 16 MiB / v7x's 32 MiB
        # scoped defaults); TODO(synk): switch to a row-tiled grid above ~32 MiB.
        cp = pltpu.CompilerParams(
            vmem_limit_bytes=int(min(vmem_bytes + (8 << 20), 100 << 20)))
    return pl.pallas_call(
        kernel,
        out_shape=jax.ShapeDtypeStruct((1, 4), jnp.float32),
        in_specs=[pl.BlockSpec(memory_space=pltpu.MemorySpace.VMEM)],
        out_specs=pl.BlockSpec(memory_space=pltpu.MemorySpace.SMEM),
        compiler_params=cp,
    )(packed)


# ------------------------------- packing layer ------------------------------

class _Packer:
    """Packs f32 regions into one (rows, Lpad) buffer; every region starts on
    an 8-row boundary and spans a multiple of 8 rows -> static in-kernel slices
    are (8,128)-tile aligned views."""

    def __init__(self, lpad):
        self.lpad = lpad
        self.regions = []
        self.rows = 0

    def add(self, arr2d, pad_value=0.0):
        a = jnp.asarray(arr2d, jnp.float32)
        r, c = a.shape
        rp = _round_up(max(r, 1), 8)
        a = jnp.pad(a, ((0, rp - r), (0, self.lpad - c)), constant_values=pad_value)
        off = self.rows
        self.regions.append(a)
        self.rows += rp
        return off, rp

    def add_cat(self, a_ctn):
        # (C, T, rows) -> padded -> reshaped to (C * T_pad, Lpad)
        a = jnp.asarray(a_ctn, jnp.float32)
        c_dim, t_dim, n = a.shape
        t_pad = _round_up(t_dim, 8)
        a = jnp.pad(a, ((0, 0), (0, t_pad - t_dim), (0, self.lpad - n)))
        a = a.reshape(c_dim * t_pad, self.lpad)
        off = self.rows
        self.regions.append(a)
        self.rows += c_dim * t_pad
        return off, c_dim * t_pad, t_pad

    def finish(self):
        return jnp.concatenate(self.regions, axis=0)


def _pad_lanes(v, lpad, fill):
    v = jnp.asarray(v, jnp.float32)
    return jnp.pad(v, (0, lpad - v.shape[0]), constant_values=fill)


def _prep_cat_pred(arr):   # (rows, C, T) -> (C, T, rows)   rows on lanes
    return jnp.transpose(jnp.asarray(arr, jnp.float32), (1, 2, 0))


def _prep_cat_truth(arr):  # (rows, T, C) -> (C, T, rows)
    return jnp.transpose(jnp.asarray(arr, jnp.float32), (2, 1, 0))


# ----------------------------- fused forward fn -----------------------------

def _build_fused_fn(out_items, hint_items):
    """out_items: ((key, type), ...); hint_items: ((key, type, kind), ...).
    Returns a jitted fn over the array leaves only — no host syncs inside."""
    kind_row = {'node': 0, 'edge': 1, 'graph': 2}

    def fn(out_preds, out_truths, hint_preds, hint_truths, hidden,
           length, bassign, edge_index):
        f32 = jnp.float32
        edge_src = edge_index[0]
        n_nodes = int(bassign.shape[0])     # static
        n_graphs = int(length.shape[0])     # static

        prepped = []
        lane_widths = [128]

        for (key, type_), p, z in zip(out_items, out_preds, out_truths):
            p = jnp.asarray(p, f32)
            z = jnp.asarray(z, f32)
            if type_ == 'categorical':
                pp, zz = _prep_cat_pred(p), _prep_cat_truth(z)
                lane_widths.append(pp.shape[2])
            else:
                pp, zz = p.reshape(1, -1), z.reshape(1, -1)   # fully lane-dense
                lane_widths.append(pp.shape[1])
            prepped.append(('output', type_, pp, zz, p.shape, None))

        for (key, type_, kind), p, z in zip(hint_items, hint_preds, hint_truths):
            p = jnp.asarray(p, f32)
            z = jnp.asarray(z, f32)
            if type_ == 'categorical':
                pp, zz = _prep_cat_pred(p), _prep_cat_truth(z)
                lane_widths.append(pp.shape[2])
            else:
                pp, zz = p.T, z.T            # (T, rows): N/E/B rows on lanes
                lane_widths.append(pp.shape[1])
            prepped.append(('hint', type_, pp, zz, p.shape, kind))

        hidden_f = jnp.asarray(hidden, f32)
        lane_widths.append(hidden_f.shape[1])
        if hint_items:
            lane_widths += [n_nodes, int(edge_src.shape[0]), n_graphs]

        lpad = _round_up(max(lane_widths), 128)
        packer = _Packer(lpad)

        # --- limits slab (row 0=node, 1=edge, 2=graph); padded lanes get -1 ---
        lim_off = None
        if hint_items:
            node_lim = (length[bassign] - 1).astype(f32)
            edge_lim = node_lim[edge_src]
            graph_lim = length.astype(f32)
            lim_rows = jnp.stack([_pad_lanes(node_lim, lpad, -1.0),
                                  _pad_lanes(edge_lim, lpad, -1.0),
                                  _pad_lanes(graph_lim, lpad, -1.0)], axis=0)
            lim_off, _ = packer.add(lim_rows, pad_value=-1.0)

        # --- term regions ---
        terms = []
        for group, type_, pp, zz, nat_shape, kind in prepped:
            if type_ == 'categorical':
                po, rows, t_pad = packer.add_cat(pp)
                to, _, _ = packer.add_cat(zz)
                c_dim = int(pp.shape[0])
                t_true = int(pp.shape[1])
                divisor = float(nat_shape[0] * nat_shape[2])
                valid_rows = valid_lanes = 0
            else:
                po, rows = packer.add(pp)
                to, _ = packer.add(zz)
                c_dim = None
                t_pad = rows
                t_true = int(pp.shape[0])
                valid_rows, valid_lanes = int(pp.shape[0]), int(pp.shape[1])
                if type_ in ('scalar', 'mask'):
                    divisor = float(int(np.prod(nat_shape, dtype=np.int64)))
                else:
                    # torch_scatter infers num_segments = idx.max()+1; we use the
                    # static graph/node counts from batch metadata instead to avoid
                    # a device->host sync (identical for CLRS batches where every
                    # graph / node index appears).
                    rest = int(np.prod(nat_shape[1:], dtype=np.int64))
                    seg = n_graphs if type_ == 'mask_one' else n_nodes
                    divisor = float(seg * rest)
            lim_row = kind_row[kind] if group == 'hint' else None
            need_valid = (type_ == 'mask') and lim_row is None
            terms.append(dict(group=group, type=type_, po=po, to=to,
                              mo=None, mrows=0, rows=rows, C=c_dim,
                              t_pad=t_pad, t_true=t_true, lim_row=lim_row,
                              need_valid=need_valid, valid_rows=valid_rows,
                              valid_lanes=valid_lanes, divisor=divisor))

        # --- hidden-state L2 region ---
        ho, hrows = packer.add(hidden_f)
        hidden_meta = (ho, hrows, int(hidden_f.shape[0]))

        packed = packer.finish()
        return _run_packed(packed, lpad, terms, lim_off, hidden_meta)

    return jax.jit(fn)


# --------------------------------- module -----------------------------------

class CLRSLoss:
    """JAX/Pallas port of baselines.core.loss.CLRSLoss (forward only).

    All loss terms (outputs + hints + hidden-L2) are packed into one
    tile-aligned buffer and reduced inside ONE fused pallas_call; the glue is
    jitted and there are no device->host syncs on the default path.
    """

    def __init__(self, specs, hidden_loss_type='l2', check_nan=False):
        self.specs = specs
        if hidden_loss_type != 'l2':
            raise NotImplementedError(f'Unknown hidden loss type {hidden_loss_type}')
        # TODO(synk): the torch version raises NaNException on NaN outputs;
        # raising requires a host sync, so it is opt-in here (the NaN count is
        # always computed in-kernel and exposed lazily).
        self.check_nan = check_nan
        self._fn_cache = {}
        self.last_output_nan_count = None

    def __call__(self, batch, outputs, hints, hidden):
        edge_attrs = set(batch['edge_attrs'])
        node_attrs = set(batch['node_attrs'])
        out_items = tuple((k, self.specs[k][2]) for k in outputs)
        hint_items = tuple(
            (k, self.specs[k][2],
             'edge' if k in edge_attrs else 'node' if k in node_attrs else 'graph')
            for k in hints)

        sig = (out_items, hint_items)
        if sig not in self._fn_cache:
            self._fn_cache[sig] = _build_fused_fn(out_items, hint_items)
        fn = self._fn_cache[sig]

        res = fn(tuple(outputs[k] for k, _ in out_items),
                 tuple(batch['data'][k] for k, _ in out_items),
                 tuple(hints[k] for k, _, _ in hint_items),
                 tuple(batch['data'][k] for k, _, _ in hint_items),
                 hidden, batch['length'], batch['batch'], batch['edge_index'])

        self.last_output_nan_count = res[0, 3]          # lazy device scalar
        if self.check_nan and bool(res[0, 3] > 0):      # optional host sync
            raise ValueError('NaN detected in outputs')
        return res[0, 0:1], res[0, 1:2], res[0, 2]


# ------------------------- single-term API parity ----------------------------

def calculate_loss(mask, truth, pred, edge_index, type_, batch_assignment):
    """API parity with the torch helper (NOT the fused hot path — CLRSLoss
    never calls this).  mask_one/pointer divisors follow torch_scatter's
    inferred num_segments, which needs a host sync here."""
    pred = jnp.asarray(pred, jnp.float32)
    truth = jnp.asarray(truth, jnp.float32)
    mask = jnp.asarray(mask, jnp.float32)

    if type_ in ('scalar', 'mask'):
        divisor = float(pred.size)
    elif type_ == 'categorical':
        divisor = float(pred.shape[0] * pred.shape[2])
    elif type_ == 'mask_one':
        rest = int(np.prod(pred.shape[1:], dtype=np.int64))
        divisor = float((int(batch_assignment.max()) + 1) * rest)
    elif type_ == 'pointer':
        rest = int(np.prod(pred.shape[1:], dtype=np.int64))
        divisor = float((int(jnp.asarray(edge_index)[0].max()) + 1) * rest)
    else:
        raise NotImplementedError(type_)

    if type_ == 'categorical':
        pp, zz, mm = _prep_cat_pred(pred), _prep_cat_truth(truth), mask.T
        lane = pp.shape[2]
    else:
        if pred.ndim == 1:
            pp, zz, mm = pred.reshape(1, -1), truth.reshape(1, -1), mask.reshape(1, -1)
        elif pred.ndim == 2:
            pp, zz, mm = pred.T, truth.T, mask.T
        else:
            raise NotImplementedError('unsupported rank for single-term loss')
        lane = pp.shape[1]

    lpad = _round_up(max(int(lane), 128), 128)
    packer = _Packer(lpad)
    if type_ == 'categorical':
        po, rows, t_pad = packer.add_cat(pp)
        to, _, _ = packer.add_cat(zz)
        mo, mrows = packer.add(mm)
        term = dict(group='output', type=type_, po=po, to=to, mo=mo, mrows=mrows,
                    rows=rows, C=int(pp.shape[0]), t_pad=t_pad,
                    t_true=int(pp.shape[1]), lim_row=None, need_valid=False,
                    valid_rows=0, valid_lanes=0, divisor=divisor)
    else:
        po, rows = packer.add(pp)
        to, _ = packer.add(zz)
        mo, mrows = packer.add(mm)
        term = dict(group='output', type=type_, po=po, to=to, mo=mo, mrows=mrows,
                    rows=rows, C=None, t_pad=rows, t_true=int(pp.shape[0]),
                    lim_row=None, need_valid=False, valid_rows=0, valid_lanes=0,
                    divisor=divisor)
    packed = packer.finish()
    res = _run_packed(packed, lpad, (term,), None, None)
    return res[0, 0]


# --------------------------- pure-JAX reference ------------------------------

def _ref_calculate_loss(mask, truth, pred, edge_index, type_, batch_assignment):
    mask = jnp.asarray(mask, jnp.float32)
    if type_ == 'scalar':
        return jnp.mean((pred - truth) ** 2 * mask)
    if type_ == 'mask':
        x, z = pred, truth
        bce = jnp.maximum(x, 0.0) - x * z + jnp.log1p(jnp.exp(-jnp.abs(x)))
        return jnp.mean(bce * mask)
    if type_ == 'mask_one':
        s = int(batch_assignment.max()) + 1
        seg = jax.ops.segment_sum(truth * pred * mask, batch_assignment, num_segments=s)
        return jnp.mean(-seg)
    if type_ == 'categorical':
        p = jnp.transpose(pred, (0, 2, 1))
        m = jnp.repeat(mask[..., None], p.shape[-1], axis=-1)
        return jnp.mean(-jnp.sum(truth * p * m, axis=-1))
    if type_ == 'pointer':
        idx = edge_index[0]
        s = int(idx.max()) + 1
        seg = jax.ops.segment_sum(truth * pred * mask, idx, num_segments=s)
        return jnp.mean(-seg)
    raise NotImplementedError(type_)


def _ref_forward(specs, batch, outputs, hints, hidden):
    out_loss = jnp.zeros((1,), jnp.float32)
    for key in outputs:
        _, _, type_, _ = specs[key]
        truth = batch['data'][key]
        out_loss = out_loss + _ref_calculate_loss(
            jnp.ones_like(truth), truth, outputs[key],
            batch['edge_index'], type_, batch['batch'])
    hint_loss = jnp.zeros((1,), jnp.float32)
    fni = batch['length'][batch['batch']] - 1
    fei = fni[batch['edge_index'][0]]
    t = jnp.arange(int(batch['length'].max()))
    for key in hints:
        _, _, type_, _ = specs[key]
        if key in batch['edge_attrs']:
            mask = (t[None, :] <= fei[:, None]).astype(jnp.float32)
        elif key in batch['node_attrs']:
            mask = (t[None, :] <= fni[:, None]).astype(jnp.float32)
        else:
            mask = (t[None, :] <= batch['length'][:, None]).astype(jnp.float32)
        hint_loss = hint_loss + _ref_calculate_loss(
            mask, batch['data'][key], hints[key],
            batch['edge_index'], type_, batch['batch'])
    return out_loss, hint_loss, jnp.mean(jnp.linalg.norm(hidden, axis=1))


# ----------------------------------- main ------------------------------------

if __name__ == "__main__":
    key = jax.random.PRNGKey(0)
    B, NPG, T, C, D, E = 2, 8, 8, 4, 32, 32
    N = B * NPG
    ks = jax.random.split(key, 16)

    length = jnp.array([T, 5], dtype=jnp.int32)                # max length == T
    batch_assignment = jnp.repeat(jnp.arange(B, dtype=jnp.int32), NPG)
    src = jnp.arange(E, dtype=jnp.int32) % N                   # covers node N-1
    dst = (jnp.arange(E, dtype=jnp.int32) * 3 + 1) % N
    edge_index = jnp.stack([src, dst])

    specs = {
        'out_scalar':   ('output', 'node', 'scalar', None),
        'out_mask':     ('output', 'node', 'mask', None),
        'out_pointer':  ('output', 'edge', 'pointer', None),
        'out_mask_one': ('output', 'node', 'mask_one', None),
        'hint_scalar':  ('hint', 'node', 'scalar', None),
        'hint_mask':    ('hint', 'edge', 'mask', None),
        'hint_cat':     ('hint', 'node', 'categorical', C),
    }

    data = {
        'out_scalar':   jax.random.normal(ks[0], (N,), jnp.float32),
        'out_mask':     (jax.random.uniform(ks[1], (N,)) > 0.5).astype(jnp.float32),
        'out_pointer':  (jax.random.uniform(ks[2], (E,)) > 0.5).astype(jnp.float32),
        'out_mask_one': (jax.random.uniform(ks[3], (N,)) > 0.5).astype(jnp.float32),
        'hint_scalar':  jax.random.normal(ks[4], (N, T), jnp.float32),
        'hint_mask':    (jax.random.uniform(ks[5], (E, T)) > 0.5).astype(jnp.float32),
        'hint_cat':     jax.nn.one_hot(jax.random.randint(ks[6], (N, T), 0, C), C,
                                       dtype=jnp.float32),       # (N, T, C)
    }
    outputs = {
        'out_scalar':   jax.random.normal(ks[7], (N,), jnp.float32),
        'out_mask':     jax.random.normal(ks[8], (N,), jnp.float32),
        'out_pointer':  jax.random.normal(ks[9], (E,), jnp.float32),
        'out_mask_one': jax.random.normal(ks[10], (N,), jnp.float32),
    }
    hints = {
        'hint_scalar':  jax.random.normal(ks[11], (N, T), jnp.float32),
        'hint_mask':    jax.random.normal(ks[12], (E, T), jnp.float32),
        'hint_cat':     jax.random.normal(ks[13], (N, C, T), jnp.float32),
    }
    hidden = jax.random.normal(ks[14], (N, D), jnp.float32)

    batch = dict(
        data=data,
        edge_index=edge_index,
        batch=batch_assignment,
        length=length,
        node_attrs=('out_scalar', 'out_mask', 'out_mask_one',
                    'hint_scalar', 'hint_cat'),
        edge_attrs=('out_pointer', 'hint_mask'),
    )

    loss_mod = CLRSLoss(specs, 'l2')
    out_loss, hint_loss, hid_loss = loss_mod(batch, outputs, hints, hidden)
    jax.block_until_ready((out_loss, hint_loss, hid_loss))

    ref_out, ref_hint, ref_hid = _ref_forward(specs, batch, outputs, hints, hidden)
    np.testing.assert_allclose(np.asarray(out_loss), np.asarray(ref_out),
                               rtol=1e-2, atol=1e-3)
    np.testing.assert_allclose(np.asarray(hint_loss), np.asarray(ref_hint),
                               rtol=1e-2, atol=1e-3)
    np.testing.assert_allclose(np.asarray(hid_loss), np.asarray(ref_hid),
                               rtol=1e-2, atol=1e-3)

    # standalone single-term API parity check
    single = calculate_loss(jnp.ones_like(data['out_scalar']), data['out_scalar'],
                            outputs['out_scalar'], edge_index, 'scalar',
                            batch_assignment)
    single_ref = _ref_calculate_loss(jnp.ones_like(data['out_scalar']),
                                     data['out_scalar'], outputs['out_scalar'],
                                     edge_index, 'scalar', batch_assignment)
    np.testing.assert_allclose(np.asarray(single), np.asarray(single_ref),
                               rtol=1e-2, atol=1e-3)

    print("KERNEL_OK")
</pallas_src>

<mosaic_0001>
module attributes {stable_mosaic.version = 11 : i64} {
  func.func @kernel(%arg0: memref<184x128xf32, #tpu.memory_space<vmem>>, %arg1: memref<1x4xf32, #tpu.memory_space<smem>>) attributes {dimension_semantics = [], scalar_prefetch = 0 : i64, scratch_operands = 0 : i64, tpu.core_type = #tpu.core_type<tc>} {
    %cst = arith.constant 0.000000e+00 : f32
    %0 = vector.broadcast %cst : f32 to vector<8x128xf32>
    %cst_0 = arith.constant 0.000000e+00 : f32
    %1 = vector.broadcast %cst_0 : f32 to vector<8x128xf32>
    %cst_1 = arith.constant 0.000000e+00 : f32
    %2 = vector.broadcast %cst_1 : f32 to vector<8x128xf32>
    %c0 = arith.constant 0 : index
    %c0_2 = arith.constant 0 : index
    %3 = vector.load %arg0[%c0, %c0_2] : memref<184x128xf32, #tpu.memory_space<vmem>>, vector<8x128xf32>
    %c8 = arith.constant 8 : index
    %c0_3 = arith.constant 0 : index
    %4 = vector.load %arg0[%c8, %c0_3] : memref<184x128xf32, #tpu.memory_space<vmem>>, vector<8x128xf32>
    %c16 = arith.constant 16 : index
    %c0_4 = arith.constant 0 : index
    %5 = vector.load %arg0[%c16, %c0_4] : memref<184x128xf32, #tpu.memory_space<vmem>>, vector<8x128xf32>
    %6 = arith.subf %4, %5 : vector<8x128xf32>
    %7 = arith.mulf %6, %6 : vector<8x128xf32>
    %8 = vector.shape_cast %7 : vector<8x128xf32> to vector<1x8x128xf32>
    %cst_5 = arith.constant dense<0.000000e+00> : vector<8x128xf32>
    %9 = vector.multi_reduction <add>, %8, %cst_5 [0] : vector<1x8x128xf32> to vector<8x128xf32>
    %cst_6 = arith.constant 6.250000e-02 : f32
    %10 = vector.broadcast %cst_6 : f32 to vector<8x128xf32>
    %11 = arith.mulf %9, %10 : vector<8x128xf32>
    %12 = arith.addf %0, %11 : vector<8x128xf32>
    %13 = arith.cmpf one, %4, %4 : vector<8x128xf32>
    %14 = arith.extui %13 : vector<8x128xi1> to vector<8x128xi32>
    %15 = arith.sitofp %14 : vector<8x128xi32> to vector<8x128xf32>
    %16 = vector.shape_cast %15 : vector<8x128xf32> to vector<1x8x128xf32>
    %cst_7 = arith.constant dense<0.000000e+00> : vector<8x128xf32>
    %17 = vector.multi_reduction <add>, %16, %cst_7 [0] : vector<1x8x128xf32> to vector<8x128xf32>
    %18 = arith.addf %2, %17 : vector<8x128xf32>
    %c24 = arith.constant 24 : index
    %c0_8 = arith.constant 0 : index
    %19 = vector.load %arg0[%c24, %c0_8] : memref<184x128xf32, #tpu.memory_space<vmem>>, vector<8x128xf32>
    %c32 = arith.constant 32 : index
    %c0_9 = arith.constant 0 : index
    %20 = vector.load %arg0[%c32, %c0_9] : memref<184x128xf32, #tpu.memory_space<vmem>>, vector<8x128xf32>
    %cst_10 = arith.constant 0.000000e+00 : f32
    %21 = vector.broadcast %cst_10 : f32 to vector<8x128xf32>
    %22 = arith.maximumf %19, %21 : vector<8x128xf32>
    %23 = arith.mulf %19, %20 : vector<8x128xf32>
    %24 = arith.subf %22, %23 : vector<8x128xf32>
    %25 = math.absf %19 : vector<8x128xf32>
    %cst_11 = arith.constant 0.000000e+00 : f32
    %26 = vector.broadcast %cst_11 : f32 to vector<8x128xf32>
    %27 = arith.subf %26, %25 : vector<8x128xf32>
    %28 = math.exp %27 : vector<8x128xf32>
    %29 = math.log1p %28 : vector<8x128xf32>
    %30 = arith.addf %24, %29 : vector<8x128xf32>
    %31 = tpu.iota {dimensions = array<i32: 0>} : vector<8x128xi32>
    %32 = tpu.iota {dimensions = array<i32: 1>} : vector<8x128xi32>
    %c1_i32 = arith.constant 1 : i32
    %33 = vector.broadcast %c1_i32 : i32 to vector<8x128xi32>
    %34 = arith.cmpi slt, %31, %33 : vector<8x128xi32>
    %c16_i32 = arith.constant 16 : i32
    %35 = vector.broadcast %c16_i32 : i32 to vector<8x128xi32>
    %36 = arith.cmpi slt, %32, %35 : vector<8x128xi32>
    %37 = arith.andi %34, %36 : vector<8x128xi1>
    %38 = arith.extui %37 : vector<8x128xi1> to vector<8x128xi32>
    %39 = arith.sitofp %38 : vector<8x128xi32> to vector<8x128xf32>
    %40 = arith.mulf %30, %39 : vector<8x128xf32>
    %41 = vector.shape_cast %40 : vector<8x128xf32> to vector<1x8x128xf32>
    %cst_12 = arith.constant dense<0.000000e+00> : vector<8x128xf32>
    %42 = vector.multi_reduction <add>, %41, %cst_12 [0] : vector<1x8x128xf32> to vector<8x128xf32>
    %cst_13 = arith.constant 6.250000e-02 : f32
    %43 = vector.broadcast %cst_13 : f32 to vector<8x128xf32>
    %44 = arith.mulf %42, %43 : vector<8x128xf32>
    %45 = arith.addf %12, %44 : vector<8x128xf32>
    %46 = arith.cmpf one, %19, %19 : vector<8x128xf32>
    %47 = arith.extui %46 : vector<8x128xi1> to vector<8x128xi32>
    %48 = arith.sitofp %47 : vector<8x128xi32> to vector<8x128xf32>
    %49 = vector.shape_cast %48 : vector<8x128xf32> to vector<1x8x128xf32>
    %cst_14 = arith.constant dense<0.000000e+00> : vector<8x128xf32>
    %50 = vector.multi_reduction <add>, %49, %cst_14 [0] : vector<1x8x128xf32> to vector<8x128xf32>
    %51 = arith.addf %18, %50 : vector<8x128xf32>
    %c40 = arith.constant 40 : index
    %c0_15 = arith.constant 0 : index
    %52 = vector.load %arg0[%c40, %c0_15] : memref<184x128xf32, #tpu.memory_space<vmem>>, vector<8x128xf32>
    %c48 = arith.constant 48 : index
    %c0_16 = arith.constant 0 : index
    %53 = vector.load %arg0[%c48, %c0_16] : memref<184x128xf32, #tpu.memory_space<vmem>>, vector<8x128xf32>
    %54 = arith.mulf %52, %53 : vector<8x128xf32>
    %cst_17 = arith.constant 0.000000e+00 : f32
    %55 = vector.broadcast %cst_17 : f32 to vector<8x128xf32>
    %56 = arith.subf %55, %54 : vector<8x128xf32>
    %57 = vector.shape_cast %56 : vector<8x128xf32> to vector<1x8x128xf32>
    %cst_18 = arith.constant dense<0.000000e+00> : vector<8x128xf32>
    %58 = vector.multi_reduction <add>, %57, %cst_18 [0] : vector<1x8x128xf32> to vector<8x128xf32>
    %cst_19 = arith.constant 6.250000e-02 : f32
    %59 = vector.broadcast %cst_19 : f32 to vector<8x128xf32>
    %60 = arith.mulf %58, %59 : vector<8x128xf32>
    %61 = arith.addf %45, %60 : vector<8x128xf32>
    %62 = arith.cmpf one, %52, %52 : vector<8x128xf32>
    %63 = arith.extui %62 : vector<8x128xi1> to vector<8x128xi32>
    %64 = arith.sitofp %63 : vector<8x128xi32> to vector<8x128xf32>
    %65 = vector.shape_cast %64 : vector<8x128xf32> to vector<1x8x128xf32>
    %cst_20 = arith.constant dense<0.000000e+00> : vector<8x128xf32>
    %66 = vector.multi_reduction <add>, %65, %cst_20 [0] : vector<1x8x128xf32> to vector<8x128xf32>
    %67 = arith.addf %51, %66 : vector<8x128xf32>
    %c56 = arith.constant 56 : index
    %c0_21 = arith.constant 0 : index
    %68 = vector.load %arg0[%c56, %c0_21] : memref<184x128xf32, #tpu.memory_space<vmem>>, vector<8x128xf32>
    %c64 = arith.constant 64 : index
    %c0_22 = arith.constant 0 : index
    %69 = vector.load %arg0[%c64, %c0_22] : memref<184x128xf32, #tpu.memory_space<vmem>>, vector<8x128xf32>
    %70 = arith.mulf %68, %69 : vector<8x128xf32>
    %cst_23 = arith.constant 0.000000e+00 : f32
    %71 = vector.broadcast %cst_23 : f32 to vector<8x128xf32>
    %72 = arith.subf %71, %70 : vector<8x128xf32>
    %73 = vector.shape_cast %72 : vector<8x128xf32> to vector<1x8x128xf32>
    %cst_24 = arith.constant dense<0.000000e+00> : vector<8x128xf32>
    %74 = vector.multi_reduction <add>, %73, %cst_24 [0] : vector<1x8x128xf32> to vector<8x128xf32>
    %cst_25 = arith.constant 5.000000e-01 : f32
    %75 = vector.broadcast %cst_25 : f32 to vector<8x128xf32>
    %76 = arith.mulf %74, %75 : vector<8x128xf32>
    %77 = arith.addf %61, %76 : vector<8x128xf32>
    %78 = arith.cmpf one, %68, %68 : vector<8x128xf32>
    %79 = arith.extui %78 : vector<8x128xi1> to vector<8x128xi32>
    %80 = arith.sitofp %79 : vector<8x128xi32> to vector<8x128xf32>
    %81 = vector.shape_cast %80 : vector<8x128xf32> to vector<1x8x128xf32>
    %cst_26 = arith.constant dense<0.000000e+00> : vector<8x128xf32>
    %82 = vector.multi_reduction <add>, %81, %cst_26 [0] : vector<1x8x128xf32> to vector<8x128xf32>
    %83 = arith.addf %67, %82 : vector<8x128xf32>
    %c72 = arith.constant 72 : index
    %c0_27 = arith.constant 0 : index
    %84 = vector.load %arg0[%c72, %c0_27] : memref<184x128xf32, #tpu.memory_space<vmem>>, vector<8x128xf32>
    %c80 = arith.constant 80 : index
    %c0_28 = arith.constant 0 : index
    %85 = vector.load %arg0[%c80, %c0_28] : memref<184x128xf32, #tpu.memory_space<vmem>>, vector<8x128xf32>
    %86 = arith.subf %84, %85 : vector<8x128xf32>
    %87 = arith.mulf %86, %86 : vector<8x128xf32>
    %88 = vector.extract_strided_slice %3 {offsets = [0, 0], sizes = [1, 128], strides = [1, 1]} : vector<8x128xf32> to vector<1x128xf32>
    %89 = tpu.iota {dimensions = array<i32: 0>} : vector<8x128xi32>
    %90 = arith.sitofp %89 : vector<8x128xi32> to vector<8x128xf32>
    %91 = vector.broadcast %88 : vector<1x128xf32> to vector<8x128xf32>
    %92 = arith.cmpf ole, %90, %91 : vector<8x128xf32>
    %93 = arith.extui %92 : vector<8x128xi1> to vector<8x128xi32>
    %94 = arith.sitofp %93 : vector<8x128xi32> to vector<8x128xf32>
    %95 = arith.mulf %87, %94 : vector<8x128xf32>
    %96 = vector.shape_cast %95 : vector<8x128xf32> to vector<1x8x128xf32>
    %cst_29 = arith.constant dense<0.000000e+00> : vector<8x128xf32>
    %97 = vector.multi_reduction <add>, %96, %cst_29 [0] : vector<1x8x128xf32> to vector<8x128xf32>
    %cst_30 = arith.constant 7.812500e-03 : f32
    %98 = vector.broadcast %cst_30 : f32 to vector<8x128xf32>
    %99 = arith.mulf %97, %98 : vector<8x128xf32>
    %100 = arith.addf %1, %99 : vector<8x128xf32>
    %c88 = arith.constant 88 : index
    %c0_31 = arith.constant 0 : index
    %101 = vector.load %arg0[%c88, %c0_31] : memref<184x128xf32, #tpu.memory_space<vmem>>, vector<8x128xf32>
    %c96 = arith.constant 96 : index
    %c0_32 = arith.constant 0 : index
    %102 = vector.load %arg0[%c96, %c0_32] : memref<184x128xf32, #tpu.memory_space<vmem>>, vector<8x128xf32>
    %cst_33 = arith.constant 0.000000e+00 : f32
    %103 = vector.broadcast %cst_33 : f32 to vector<8x128xf32>
    %104 = arith.maximumf %101, %103 : vector<8x128xf32>
    %105 = arith.mulf %101, %102 : vector<8x128xf32>
    %106 = arith.subf %104, %105 : vector<8x128xf32>
    %107 = math.absf %101 : vector<8x128xf32>
    %cst_34 = arith.constant 0.000000e+00 : f32
    %108 = vector.broadcast %cst_34 : f32 to vector<8x128xf32>
    %109 = arith.subf %108, %107 : vector<8x128xf32>
    %110 = math.exp %109 : vector<8x128xf32>
    %111 = math.log1p %110 : vector<8x128xf32>
    %112 = arith.addf %106, %111 : vector<8x128xf32>
    %113 = vector.extract_strided_slice %3 {offsets = [1, 0], sizes = [1, 128], strides = [1, 1]} : vector<8x128xf32> to vector<1x128xf32>
    %114 = tpu.iota {dimensions = array<i32: 0>} : vector<8x128xi32>
    %115 = arith.sitofp %114 : vector<8x128xi32> to vector<8x128xf32>
    %116 = vector.broadcast %113 : vector<1x128xf32> to vector<8x128xf32>
    %117 = arith.cmpf ole, %115, %116 : vector<8x128xf32>
    %118 = arith.extui %117 : vector<8x128xi1> to vector<8x128xi32>
    %119 = arith.sitofp %118 : vector<8x128xi32> to vector<8x128xf32>
    %120 = arith.mulf %112, %119 : vector<8x128xf32>
    %121 = vector.shape_cast %120 : vector<8x128xf32> to vector<1x8x128xf32>
    %cst_35 = arith.constant dense<0.000000e+00> : vector<8x128xf32>
    %122 = vector.multi_reduction <add>, %121, %cst_35 [0] : vector<1x8x128xf32> to vector<8x128xf32>
    %cst_36 = arith.constant 3.906250e-03 : f32
    %123 = vector.broadcast %cst_36 : f32 to vector<8x128xf32>
    %124 = arith.mulf %122, %123 : vector<8x128xf32>
    %125 = arith.addf %100, %124 : vector<8x128xf32>
    %c104 = arith.constant 104 : index
    %c0_37 = arith.constant 0 : index
    %126 = vector.load %arg0[%c104, %c0_37] : memref<184x128xf32, #tpu.memory_space<vmem>>, vector<32x128xf32>
    %c136 = arith.constant 136 : index
    %c0_38 = arith.constant 0 : index
    %127 = vector.load %arg0[%c136, %c0_38] : memref<184x128xf32, #tpu.memory_space<vmem>>, vector<32x128xf32>
    %128 = arith.mulf %126, %127 : vector<32x128xf32>
    %cst_39 = arith.constant 0.000000e+00 : f32
    %129 = vector.broadcast %cst_39 : f32 to vector<32x128xf32>
    %130 = arith.subf %129, %128 : vector<32x128xf32>
    %131 = vector.shape_cast %130 : vector<32x128xf32> to vector<4x8x128xf32>
    %132 = vector.shape_cast %94 : vector<8x128xf32> to vector<1x8x128xf32>
    %133 = vector.broadcast %132 : vector<1x8x128xf32> to vector<4x8x128xf32>
    %134 = arith.mulf %131, %133 : vector<4x8x128xf32>
    %cst_40 = arith.constant dense<0.000000e+00> : vector<8x128xf32>
    %135 = vector.multi_reduction <add>, %134, %cst_40 [0] : vector<4x8x128xf32> to vector<8x128xf32>
    %cst_41 = arith.constant 7.812500e-03 : f32
    %136 = vector.broadcast %cst_41 : f32 to vector<8x128xf32>
    %137 = arith.mulf %135, %136 : vector<8x128xf32>
    %138 = arith.addf %125, %137 : vector<8x128xf32>
    %c168 = arith.constant 168 : index
    %c0_42 = arith.constant 0 : index
    %139 = vector.load %arg0[%c168, %c0_42] : memref<184x128xf32, #tpu.memory_space<vmem>>, vector<16x128xf32>
    %140 = arith.mulf %139, %139 : vector<16x128xf32>
    %cst_43 = arith.constant dense<0.000000e+00> : vector<16xf32>
    %141 = vector.multi_reduction <add>, %140, %cst_43 [1] : vector<16x128xf32> to vector<16xf32>
    %142 = vector.shape_cast %141 : vector<16xf32> to vector<16x1xf32>
    %143 = math.sqrt %142 : vector<16x1xf32>
    %144 = vector.shape_cast %143 : vector<16x1xf32> to vector<1x16x1xf32>
    %cst_44 = arith.constant dense<0.000000e+00> : vector<1xf32>
    %145 = vector.multi_reduction <add>, %144, %cst_44 [1, 2] : vector<1x16x1xf32> to vector<1xf32>
    %146 = vector.shape_cast %145 : vector<1xf32> to vector<1x1x1xf32>
    %147 = vector.extract %146[0, 0, 0] : f32 from vector<1x1x1xf32>
    %cst_45 = arith.constant 6.250000e-02 : f32
    %148 = arith.mulf %147, %cst_45 : f32
    %149 = vector.shape_cast %77 : vector<8x128xf32> to vector<1x8x128xf32>
    %cst_46 = arith.constant dense<0.000000e+00> : vector<1xf32>
    %150 = vector.multi_reduction <add>, %149, %cst_46 [1, 2] : vector<1x8x128xf32> to vector<1xf32>
    %151 = vector.shape_cast %150 : vector<1xf32> to vector<1x1x1xf32>
    %152 = vector.extract %151[0, 0, 0] : f32 from vector<1x1x1xf32>
    %c0_47 = arith.constant 0 : index
    %c0_48 = arith.constant 0 : index
    %153 = memref.load %arg1[%c0_47, %c0_48] : memref<1x4xf32, #tpu.memory_space<smem>>
    memref.store %152, %arg1[%c0_47, %c0_48] : memref<1x4xf32, #tpu.memory_space<smem>>
    %154 = vector.shape_cast %138 : vector<8x128xf32> to vector<1x8x128xf32>
    %cst_49 = arith.constant dense<0.000000e+00> : vector<1xf32>
    %155 = vector.multi_reduction <add>, %154, %cst_49 [1, 2] : vector<1x8x128xf32> to vector<1xf32>
    %156 = vector.shape_cast %155 : vector<1xf32> to vector<1x1x1xf32>
    %157 = vector.extract %156[0, 0, 0] : f32 from vector<1x1x1xf32>
    %c0_50 = arith.constant 0 : index
    %c1 = arith.constant 1 : index
    %158 = memref.load %arg1[%c0_50, %c1] : memref<1x4xf32, #tpu.memory_space<smem>>
    memref.store %157, %arg1[%c0_50, %c1] : memref<1x4xf32, #tpu.memory_space<smem>>
    %c0_51 = arith.constant 0 : index
    %c2 = arith.constant 2 : index
    %159 = memref.load %arg1[%c0_51, %c2] : memref<1x4xf32, #tpu.memory_space<smem>>
    memref.store %148, %arg1[%c0_51, %c2] : memref<1x4xf32, #tpu.memory_space<smem>>
    %160 = vector.shape_cast %83 : vector<8x128xf32> to vector<1x8x128xf32>
    %cst_52 = arith.constant dense<0.000000e+00> : vector<1xf32>
    %161 = vector.multi_reduction <add>, %160, %cst_52 [1, 2] : vector<1x8x128xf32> to vector<1xf32>
    %162 = vector.shape_cast %161 : vector<1xf32> to vector<1x1x1xf32>
    %163 = vector.extract %162[0, 0, 0] : f32 from vector<1x1x1xf32>
    %c0_53 = arith.constant 0 : index
    %c3 = arith.constant 3 : index
    %164 = memref.load %arg1[%c0_53, %c3] : memref<1x4xf32, #tpu.memory_space<smem>>
    memref.store %163, %arg1[%c0_53, %c3] : memref<1x4xf32, #tpu.memory_space<smem>>
    return
  }
}

</mosaic_0001>

<llo_original>
// kernel: fn.1
$region0: #{fn.1}
  #allocation0 [shape = 'u32[]', space=smem, size = 0x4, offset = 0x4, fixed_abs, tag = 'smem constant byte address 0x4 - core index']
  #allocation1 [shape = 'u32[144,128]{1,0:T(1,128)}', space=vmem, size = 0x12000, scoped, tag = 'internal scratch']
  %s0 = inlined_call_operand.vmem [shape: f32[184,128], index: 0, kind: input, shape index: {}]
  %s1 = inlined_call_operand.hbm [shape: f32[1,4], index: 1, kind: output, shape index: {}]
  %s2 = sld [smem:[#allocation0]]
  $region14: #{fn.1} parent=0
    _
  %s4 = ssub.s32 1, %s2
  %s5 = scalar_select 0, %s4, %s2
  $region1: #{fn.1} parent=0
    #allocation2 [shape = 'u8[512]{0}', space=smem, size = 0x200, scoped, tag = 'output window, operand 0, single buffered']
    #allocation3 [shape = 's32[1]{0}', space=sflag, size = 0x4, scoped, tag = 'scoped memory for fn.1']
    %6 = vsyncpa [#allocation3], 0
    // Predicated region
    $region2: #{fn.1} parent=1 // pred_check
      _
    $region3: #{fn.1} parent=1 // pred_check_branch
      %8 = sbr.rel (0) target = $region5
    $region4: #{fn.1} parent=1 // pred_region
      _
    $region5: #{fn.1} parent=1 // pred_fallthru
      _
    %v9 = vld [vmem:[%s0] sm:$0xff]
    %v10 = vld [vmem:[%s0 + $0x8] sm:$0xff]
    %v11 = vld [vmem:[%s0 + $0x10] sm:$0xff]
    %v12 = vsub.f32 %v10, %v11
    %v13 = vmul.f32 %v12, %v12
    %v14 = vadd.f32 %v13, 0.0
    %v15 = vmul.f32 %v14, 0.0625
    %v16 = vadd.f32 %v15, 0.0
    %vm17 = vcmp.ne.f32.partialorder %v10, %v10
    %v18 = vsel %vm17, 1, 0
    %v19 = vcvt.s32.f32 %v18
    %v20 = vadd.f32 %v19, 0.0
    %v21 = vadd.f32 %v20, 0.0
    %v22 = vld [vmem:[%s0 + $0x18] sm:$0xff]
    %v23 = vld [vmem:[%s0 + $0x20] sm:$0xff]
    %v24 = vmax.f32 %v22, 0.0
    %v25 = vmul.f32 %v22, %v23
    %v26 = vsub.f32 %v24, %v25
    %v27 = vand.u32 2147483647, %v22
    %v28 = vsub.f32 0.0, %v27
    %v29 = vmul.f32 %v28, 1.442695
    %v30 = vpow.pop %v29
    %v31 = vadd.f32 %v30, 1.0
    %v32 = vlog2.pop %v31
    %v33 = vmul.f32 %v32, 0.6931472
    %v34 = vmul.f32 -0.5, %v30
    %v35 = vadd.f32 %v34, 1.0
    %v36 = vmul.f32 %v35, %v30
    %v37 = vand.u32 2147483647, %v30
    %vm38 = vcmp.lt.f32.partialorder %v37, 0.0004427343
    %v39 = vsel %vm38, %v36, %v33
    %v40 = vadd.f32 %v26, %v39
    %v41 = vlaneseq
    %v42 = vshrl.u32 %v41, 7
    %v43 = vlaneseq
    %v44 = vand.u32 %v43, 127
    %vm45 = vcmp.lt.s32.totalorder %v42, 1
    %vm46 = vcmp.lt.s32.totalorder %v44, 16
    %vm47 = vmand %vm45, %vm46
    %v48 = vsel %vm47, 1, 0
    %v49 = vcvt.s32.f32 %v48
    %v50 = vmul.f32 %v40, %v49
    %v51 = vadd.f32 %v50, 0.0
    %v52 = vmul.f32 %v51, 0.0625
    %v53 = vadd.f32 %v16, %v52
    %vm54 = vcmp.ne.f32.partialorder %v22, %v22
    %v55 = vsel %vm54, 1, 0
    %v56 = vcvt.s32.f32 %v55
    %v57 = vadd.f32 %v56, 0.0
    %v58 = vadd.f32 %v21, %v57
    %v59 = vld [vmem:[%s0 + $0x28] sm:$0xff]
    %v60 = vld [vmem:[%s0 + $0x30] sm:$0xff]
    %v61 = vmul.f32 %v59, %v60
    %v62 = vsub.f32 0.0, %v61
    %v63 = vadd.f32 %v62, 0.0
    %v64 = vmul.f32 %v63, 0.0625
    %v65 = vadd.f32 %v53, %v64
    %vm66 = vcmp.ne.f32.partialorder %v59, %v59
    %v67 = vsel %vm66, 1, 0
    %v68 = vcvt.s32.f32 %v67
    %v69 = vadd.f32 %v68, 0.0
    %v70 = vadd.f32 %v58, %v69
    %v71 = vld [vmem:[%s0 + $0x38] sm:$0xff]
    %v72 = vld [vmem:[%s0 + $0x40] sm:$0xff]
    %v73 = vmul.f32 %v71, %v72
    %v74 = vsub.f32 0.0, %v73
    %v75 = vadd.f32 %v74, 0.0
    %v76 = vmul.f32 %v75, 0.5
    %v77 = vadd.f32 %v65, %v76
    %vm78 = vcmp.ne.f32.partialorder %v71, %v71
    %v79 = vsel %vm78, 1, 0
    %v80 = vcvt.s32.f32 %v79
    %v81 = vadd.f32 %v80, 0.0
    %v82 = vadd.f32 %v70, %v81
    %v83 = vld [vmem:[%s0 + $0x48] sm:$0xff]
    %v84 = vld [vmem:[%s0 + $0x50] sm:$0xff]
    %v85 = vsub.f32 %v83, %v84
    %v86 = vmul.f32 %v85, %v85
    %v87 = vcvt.s32.f32 %v42
    %v88 = vlaneseq
    %v89 = vshrl.u32 %v88, 7
    %v90 = vsub.s32 0, %v89
    %v91 = vrot.slane %v9, %v90
    %vm92 = vcmp.le.f32.partialorder %v87, %v91
    %v93 = vsel %vm92, 1, 0
    %v94 = vcvt.s32.f32 %v93
    %v95 = vmul.f32 %v86, %v94
    %v96 = vadd.f32 %v95, 0.0
    %v97 = vmul.f32 %v96, 0.0078125
    %v98 = vadd.f32 %v97, 0.0
    %v99 = vld [vmem:[%s0 + $0x58] sm:$0xff]
    %v100 = vld [vmem:[%s0 + $0x60] sm:$0xff]
    %v101 = vmax.f32 %v99, 0.0
    %v102 = vmul.f32 %v99, %v100
    %v103 = vsub.f32 %v101, %v102
    %v104 = vand.u32 2147483647, %v99
    %v105 = vsub.f32 0.0, %v104
    %v106 = vmul.f32 %v105, 1.442695
    %v107 = vpow.pop %v106
    %v108 = vadd.f32 %v107, 1.0
    %v109 = vlog2.pop %v108
    %v110 = vmul.f32 %v109, 0.6931472
    %v111 = vmul.f32 -0.5, %v107
    %v112 = vadd.f32 %v111, 1.0
    %v113 = vmul.f32 %v112, %v107
    %v114 = vand.u32 2147483647, %v107
    %vm115 = vcmp.lt.f32.partialorder %v114, 0.0004427343
    %v116 = vsel %vm115, %v113, %v110
    %v117 = vadd.f32 %v103, %v116
    %v118 = vlaneseq
    %v119 = vshrl.u32 %v118, 7
    %v120 = vsub.s32 1, %v119
    %v121 = vrot.slane %v9, %v120
    %vm122 = vcmp.le.f32.partialorder %v87, %v121
    %v123 = vsel %vm122, 1, 0
    %v124 = vcvt.s32.f32 %v123
    %v125 = vmul.f32 %v117, %v124
    %v126 = vadd.f32 %v125, 0.0
    %v127 = vmul.f32 %v126, 0.00390625
    %v128 = vadd.f32 %v98, %v127
    %v129 = vld [vmem:[%s0 + $0x68] sm:$0xff]
    %v130 = vld [vmem:[%s0 + $0x70] sm:$0xff]
    %v131 = vld [vmem:[%s0 + $0x78] sm:$0xff]
    %v132 = vld [vmem:[%s0 + $0x80] sm:$0xff]
    %v133 = vld [vmem:[%s0 + $0x88] sm:$0xff]
    %v134 = vld [vmem:[%s0 + $0x90] sm:$0xff]
    %v135 = vld [vmem:[%s0 + $0x98] sm:$0xff]
    %v136 = vld [vmem:[%s0 + $0xa0] sm:$0xff]
    %v137 = vmul.f32 %v129, %v133
    %v138 = vmul.f32 %v130, %v134
    %v139 = vmul.f32 %v131, %v135
    %v140 = vmul.f32 %v132, %v136
    %v141 = vsub.f32 0.0, %v137
    %v142 = vsub.f32 0.0, %v138
    %v143 = vsub.f32 0.0, %v139
    %v144 = vsub.f32 0.0, %v140
    %v145 = vmul.f32 %v141, %v94
    %v146 = vmul.f32 %v142, %v94
    %v147 = vmul.f32 %v143, %v94
    %v148 = vmul.f32 %v144, %v94
    %v149 = vadd.f32 %v145, %v146
    %v150 = vadd.f32 %v149, %v147
    %v151 = vadd.f32 %v150, %v148
    %v152 = vmul.f32 %v151, 0.0078125
    %v153 = vadd.f32 %v128, %v152
    %v154 = vld [vmem:[%s0 + $0xa8] sm:$0xff]
    %v155 = vld [vmem:[%s0 + $0xb0] sm:$0xff]
    %v156 = vmul.f32 %v154, %v154
    %v157 = vmul.f32 %v155, %v155
    %158 = vadd.xlane.f32.xlu0 %v156
    %v159 = vpop.xlane.xlu0 %158
    %160 = vadd.xlane.f32.xlu0 %v157
    %v161 = vpop.xlane.xlu0 %160
    %v162 = vrsqrt.pop %v159
    %v163 = vmul.f32 %v159, %v162
    %vm164 = vcmp.eq.f32.partialorder %v159, inf
    %v165 = vsel %vm164, %v159, %v163
    %vm166 = vcmp.eq.f32.partialorder %v159, 0.0
    %v167 = vand.u32 %v159, 2147483648
    %v168 = vsel %vm166, %v167, %v165
    %v169 = vrsqrt.pop %v161
    %v170 = vmul.f32 %v161, %v169
    %vm171 = vcmp.eq.f32.partialorder %v161, inf
    %v172 = vsel %vm171, %v161, %v170
    %vm173 = vcmp.eq.f32.partialorder %v161, 0.0
    %v174 = vand.u32 %v161, 2147483648
    %v175 = vsel %vm173, %v174, %v172
    %vm176 = vcmask 7168
    %v177 = vsel %vm176, %v168, 0.0
    %v178 = vsel %vm176, %v175, 0.0
    %v179 = vadd.f32 %v177, %v178
    %180 = vadd.xlane.f32.xlu0 %v179
    %v181 = vpop.xlane.xlu0 %180
    %v182 = vrot.slane %v181, 4
    %v183 = vadd.f32 %v181, %v182
    %v184 = vrot.slane %v183, 2
    %v185 = vadd.f32 %v183, %v184
    %v186 = vrot.slane %v185, 1
    %v187 = vadd.f32 %v185, %v186
    %s188 = vtos %v187
    %s189 = smul.f32 %s188, 0.0625
    %190 = vadd.xlane.f32.xlu0 %v77
    %v191 = vpop.xlane.xlu0 %190
    %v192 = vrot.slane %v191, 4
    %v193 = vadd.f32 %v191, %v192
    %v194 = vrot.slane %v193, 2
    %v195 = vadd.f32 %v193, %v194
    %v196 = vrot.slane %v195, 1
    %v197 = vadd.f32 %v195, %v196
    %s198 = vtos %v197
    %s199 = scalar_lea.smem [#allocation2], 0
    %200 = sst [smem:[%s199]] %s198
    %201 = vadd.xlane.f32.xlu0 %v153
    %v202 = vpop.xlane.xlu0 %201
    %v203 = vrot.slane %v202, 4
    %v204 = vadd.f32 %v202, %v203
    %v205 = vrot.slane %v204, 2
    %v206 = vadd.f32 %v204, %v205
    %v207 = vrot.slane %v206, 1
    %v208 = vadd.f32 %v206, %v207
    %s209 = vtos %v208
    %s210 = scalar_lea.smem [#allocation2], 1
    %211 = sst [smem:[%s210]] %s209
    %s212 = scalar_lea.smem [#allocation2], 2
    %213 = sst [smem:[%s212]] %s189
    %214 = vadd.xlane.f32.xlu0 %v82
    %v215 = vpop.xlane.xlu0 %214
    %v216 = vrot.slane %v215, 4
    %v217 = vadd.f32 %v215, %v216
    %v218 = vrot.slane %v217, 2
    %v219 = vadd.f32 %v217, %v218
    %v220 = vrot.slane %v219, 1
    %v221 = vadd.f32 %v219, %v220
    %s222 = vtos %v221
    %s223 = scalar_lea.smem [#allocation2], 3
    %224 = sst [smem:[%s223]] %s222
    // Predicated region
    $region6: #{fn.1} parent=1 // pred_check
      _
    $region7: #{fn.1} parent=1 // pred_check_branch
      %226 = sbr.rel (0) target = $region9
    $region8: #{fn.1} parent=1 // pred_region
      %s228 = ssub.s32 16, 16
      %229 = vsyncadd [#allocation3], %s228
      %232 = dma.smem_to_hbm [#allocation2], 16, %s1, [#allocation3]
    $region9: #{fn.1} parent=1 // pred_fallthru
      _
    // Predicated region
    $region10: #{fn.1} parent=1 // pred_check
      _
    $region11: #{fn.1} parent=1 // pred_check_branch
      %234 = sbr.rel (0) target = $region13
    $region12: #{fn.1} parent=1 // pred_region
      %235 = dma.done [#allocation3], 16
    $region13: #{fn.1} parent=1 // pred_fallthru
      _
    %236 = sfence
    %237 = vsyncpa [#allocation3], 1

</llo_original>
